<compile_context>
chip_gen: v7x
topology: tpu7x:2x2x1
jax: 0.10.0
libtpu: 0.0.40
codegen_flags: <defaults>
</compile_context>

<pallas_src>
import jax
import jax.numpy as jnp
from jax import lax
from jax.experimental import pallas as pl
from jax.experimental.pallas import tpu as pltpu

_LANE = 128
_SUBLANE = 8


def _cdiv(a, b):
    return -(-a // b)


def _pad_to(n, m):
    return _cdiv(n, m) * m


def _is_megacore():
    """True on chips with 2 TensorCores per chip (v7x / megacore v4)."""
    try:
        kind = jax.devices()[0].device_kind.lower().replace(" ", "")
        return ("v7" in kind) or ("tpu7" in kind) or ("v4" in kind)
    except Exception:
        return False


def _mlp_sigmoid(avg, mx, w1_ref, w2_ref, b_blk):
    """Shared MLP on the stacked (2*b_blk, C) operand + sigmoid(avg_out+max_out)."""
    stacked = jnp.concatenate([avg, mx], axis=0)                 # (2*b_blk, C)
    w1 = w1_ref[...].astype(jnp.float32)                         # (C, Cr)
    w2 = w2_ref[...].astype(jnp.float32)                         # (Cr, C)
    h = jnp.maximum(jnp.dot(stacked, w1, preferred_element_type=jnp.float32), 0.0)
    y = jnp.dot(h, w2, preferred_element_type=jnp.float32)       # (2*b_blk, C)
    return jax.nn.sigmoid(y[:b_blk] + y[b_blk:])                 # (b_blk, C)


def _make_single_step_kernel(*, hw_total, b_blk):
    """Whole H*W in one grid step: reduce the tile directly, no scratch."""

    def kernel(x_ref, w1_ref, w2_ref, o_ref):
        xx = x_ref[...].astype(jnp.float32)                      # (b_blk, C, HW)
        avg = jnp.sum(xx, axis=-1) * (1.0 / hw_total)            # (b_blk, C)
        mx = jnp.max(xx, axis=-1)                                # (b_blk, C)
        o_ref[...] = _mlp_sigmoid(avg, mx, w1_ref, w2_ref, b_blk).astype(o_ref.dtype)

    return kernel


def _make_tiled_kernel(*, hw_total, t_hw, n_hw, b_blk):
    """HW tiled across an 'arbitrary' grid axis; running sum/max in VMEM scratch."""
    assert t_hw % _LANE == 0 and n_hw >= 2
    n_full = t_hw // _LANE
    rem_last = hw_total - (n_hw - 1) * t_hw            # valid elems in last tile
    last_is_partial = rem_last != t_hw

    def accum(x_ref, sum_acc, max_acc, num):
        # `num` full 128-lane chunks, accumulated directly into the scratch refs.
        if num <= 0:
            return

        def body(j, carry):
            start = pl.multiple_of(j * _LANE, _LANE)
            cx = x_ref[:, :, pl.ds(start, _LANE)].astype(jnp.float32)
            sum_acc[...] = sum_acc[...] + cx
            max_acc[...] = jnp.maximum(max_acc[...], cx)
            return carry

        if num <= 8:
            for j in range(num):          # short: fully unrolled statically
                body(j, 0)
        else:
            lax.fori_loop(0, num, body, 0, unroll=8)

    def kernel(x_ref, w1_ref, w2_ref, o_ref, sum_acc, max_acc):
        hw_i = pl.program_id(1)
        last = pl.num_programs(1) - 1

        @pl.when(hw_i == 0)
        def _init():
            sum_acc[...] = jnp.zeros(sum_acc.shape, sum_acc.dtype)
            max_acc[...] = jnp.full(max_acc.shape, -jnp.inf, max_acc.dtype)

        if not last_is_partial:
            # Every tile is fully valid: single unmasked fast path.
            accum(x_ref, sum_acc, max_acc, n_full)
        else:
            @pl.when(hw_i != last)
            def _full_tile():                       # unmasked fast path
                accum(x_ref, sum_acc, max_acc, n_full)

            @pl.when(hw_i == last)
            def _last_tile():                       # masking only here
                n_last_full = rem_last // _LANE
                tail = rem_last % _LANE
                accum(x_ref, sum_acc, max_acc, n_last_full)
                if tail:
                    start = n_last_full * _LANE
                    cx = x_ref[:, :, start:start + _LANE].astype(jnp.float32)
                    lane = lax.broadcasted_iota(jnp.int32, (1, 1, _LANE), 2)
                    keep = lane < tail
                    sum_acc[...] = sum_acc[...] + jnp.where(keep, cx, 0.0)
                    max_acc[...] = jnp.maximum(
                        max_acc[...], jnp.where(keep, cx, -jnp.inf))

        @pl.when(hw_i == last)
        def _finalize():
            # Single cross-lane reduce per pooled quantity.
            avg = jnp.sum(sum_acc[...], axis=-1) * (1.0 / hw_total)   # (b_blk, C)
            mx = jnp.max(max_acc[...], axis=-1)                       # (b_blk, C)
            o_ref[...] = _mlp_sigmoid(avg, mx, w1_ref, w2_ref, b_blk).astype(o_ref.dtype)

    return kernel


def channel_attention(x, w1, w2, *, b_blk=None, t_hw=None,
                      target_block_bytes=2 << 20,
                      vmem_cap_bytes=24 << 20,
                      out_dtype=None):
    """x: (B, C, H, W) NCHW; w1: (Cr, C) conv1 weight (squeezed); w2: (C, Cr).

    Returns sigmoid channel attention of shape (B, C, 1, 1), matching PyTorch.
    Accepts f32 or bf16 input; pooling is accumulated in f32.
    """
    B, C, H, W = x.shape
    Cr = w1.shape[0]
    assert w1.shape == (Cr, C) and w2.shape == (C, Cr), (w1.shape, w2.shape)
    HW = H * W
    itemsize = jnp.dtype(x.dtype).itemsize
    w_itemsize = jnp.dtype(w1.dtype).itemsize
    if out_dtype is None:
        out_dtype = x.dtype
    o_itemsize = jnp.dtype(out_dtype).itemsize

    # --- spatial tile: whole extent if the per-row footprint fits the target,
    #     otherwise a 128-multiple tile sized to ~target_block_bytes.
    if t_hw is None:
        if C * HW * itemsize <= target_block_bytes:
            t_hw = HW
        else:
            t_hw = min(HW, max(_LANE,
                               (target_block_bytes // (C * itemsize)) // _LANE * _LANE))
    t_hw = int(min(int(t_hw), HW))
    if t_hw != HW and t_hw % _LANE != 0:
        raise ValueError("t_hw must be a multiple of 128 or equal to H*W")

    # --- batch block: fold rows until the x block is ~1-4 MiB.  Keep >= 2
    #     batch grid steps only on megacore parts (v7x) where it buys a core.
    if b_blk is None:
        blk_bytes = C * t_hw * itemsize
        b_blk = max(1, min(B, int(target_block_bytes // max(1, blk_bytes))))
        if _is_megacore() and B >= 2:
            b_blk = min(b_blk, _cdiv(B, 2))
    b_blk = max(1, min(int(b_blk), B))

    # --- VMEM accounting (padded to (8,128) tiles): double-buffered input,
    #     double-buffered weights & output, plus the two f32 scratch slabs.
    def vmem_need(bb, th):
        tiled = th < HW
        x_bytes = 2 * bb * _pad_to(C, _SUBLANE) * _pad_to(th, _LANE) * itemsize
        w_bytes = 2 * (_pad_to(C, _SUBLANE) * _pad_to(Cr, _LANE)
                       + _pad_to(Cr, _SUBLANE) * _pad_to(C, _LANE)) * w_itemsize
        o_bytes = 2 * _pad_to(bb, _SUBLANE) * _pad_to(C, _LANE) * o_itemsize
        s_bytes = (2 * bb * _pad_to(C, _SUBLANE) * _LANE * 4) if tiled else 0
        return x_bytes + w_bytes + o_bytes + s_bytes

    while vmem_need(b_blk, t_hw) > vmem_cap_bytes:
        if b_blk > 1:
            b_blk = _cdiv(b_blk, 2)
        elif t_hw > _LANE:
            t_hw = max(_LANE, ((t_hw // 2) // _LANE) * _LANE)
        else:
            break

    n_b = _cdiv(B, b_blk)
    n_hw = _cdiv(HW, t_hw)
    single_step = (n_hw == 1)

    x_flat = x.reshape(B, C, HW)
    w1t = jnp.transpose(w1)   # (C, Cr)
    w2t = jnp.transpose(w2)   # (Cr, C)

    if single_step:
        kernel = _make_single_step_kernel(hw_total=HW, b_blk=b_blk)
        grid = (n_b,)
        in_specs = [
            pl.BlockSpec((b_blk, C, t_hw), lambda b: (b, 0, 0)),
            pl.BlockSpec((C, Cr), lambda b: (0, 0)),
            pl.BlockSpec((Cr, C), lambda b: (0, 0)),
        ]
        out_specs = pl.BlockSpec((b_blk, C), lambda b: (b, 0))
        scratch_shapes = []
        dim_sem = ("parallel",)
    else:
        kernel = _make_tiled_kernel(hw_total=HW, t_hw=t_hw, n_hw=n_hw, b_blk=b_blk)
        grid = (n_b, n_hw)
        in_specs = [
            pl.BlockSpec((b_blk, C, t_hw), lambda b, h: (b, 0, h)),
            pl.BlockSpec((C, Cr), lambda b, h: (0, 0)),
            pl.BlockSpec((Cr, C), lambda b, h: (0, 0)),
        ]
        out_specs = pl.BlockSpec((b_blk, C), lambda b, h: (b, 0))
        scratch_shapes = [
            pltpu.VMEM((b_blk, C, _LANE), jnp.float32),  # running sum partials
            pltpu.VMEM((b_blk, C, _LANE), jnp.float32),  # running max partials
        ]
        dim_sem = ("parallel", "arbitrary")

    needed = vmem_need(b_blk, t_hw)
    vmem_limit = int(min(max(needed + needed // 2 + (2 << 20), 8 << 20), 48 << 20))

    cost = pl.CostEstimate(
        flops=int(3 * B * C * HW            # pooling (sum + max + cast), dominant
                  + 8 * B * C * Cr),        # two tiny stacked matmuls
        transcendentals=int(B * C),         # sigmoid
        bytes_accessed=int(B * C * HW * itemsize
                           + (w1.size + w2.size) * w_itemsize
                           + B * C * o_itemsize))

    out = pl.pallas_call(
        kernel,
        out_shape=jax.ShapeDtypeStruct((B, C), out_dtype),
        grid=grid,
        in_specs=in_specs,
        out_specs=out_specs,
        scratch_shapes=scratch_shapes,
        compiler_params=pltpu.CompilerParams(
            dimension_semantics=dim_sem,
            vmem_limit_bytes=vmem_limit),
        cost_estimate=cost,
    )(x_flat, w1t, w2t)

    return out.reshape(B, C, 1, 1)


def channel_attention_ref(x, w1, w2):
    """Pure-JAX reference mirroring the PyTorch ChannelAttention module."""
    avg = jnp.mean(x.astype(jnp.float32), axis=(2, 3))   # (B, C)
    mx = jnp.max(x.astype(jnp.float32), axis=(2, 3))     # (B, C)

    def fc(v):
        h = jnp.maximum(v @ w1.T, 0.0)
        return h @ w2.T

    return jax.nn.sigmoid(fc(avg) + fc(mx))[:, :, None, None]


if __name__ == "__main__":
    def run_case(name, B, C, H, W, reduction, seed, **kw):
        Cr = max(1, C // reduction)
        key = jax.random.PRNGKey(seed)
        kx, k1, k2 = jax.random.split(key, 3)
        x = jax.random.normal(kx, (B, C, H, W), dtype=jnp.float32)
        bound1 = 1.0 / float(C) ** 0.5
        bound2 = 1.0 / float(Cr) ** 0.5
        w1 = jax.random.uniform(k1, (Cr, C), minval=-bound1, maxval=bound1,
                                dtype=jnp.float32)
        w2 = jax.random.uniform(k2, (C, Cr), minval=-bound2, maxval=bound2,
                                dtype=jnp.float32)

        out = jax.block_until_ready(channel_attention(x, w1, w2, **kw))
        ref = channel_attention_ref(x, w1, w2)
        assert out.shape == (B, C, 1, 1), (name, out.shape)
        err = float(jnp.max(jnp.abs(out.astype(jnp.float32) - ref)))
        assert err < 1e-4, (name, err)

    # Main small case (single HW step, whole extent is a 128 multiple).
    run_case("base", 2, 64, 16, 16, 16, 0)
    # HW tiled with a masked partial last tile (400 = 3*128 + 16).
    run_case("tiled_mask", 2, 64, 20, 20, 16, 1, t_hw=128)
    # Single HW step where H*W (196) is >=128 but not a multiple of 128.
    run_case("tail_196", 2, 128, 14, 14, 16, 2)
    # EfficientNet-like late stage: C=1280, 7x7 spatial, batch folded into one
    # (or two on megacore) blocks; exercises the partial last batch block.
    run_case("effnet_7x7", 3, 1280, 7, 7, 16, 3)
    # Long spatial axis, forced tiling: >8 chunks per tile -> fori_loop path,
    # plus a masked tail on the last tile (4160 = 3*1280 + 320, 320 = 2*128+64).
    run_case("fori_tiled", 1, 32, 65, 64, 16, 4, t_hw=1280)

    print("KERNEL_OK")
</pallas_src>

<mosaic_0001>
module attributes {stable_mosaic.version = 11 : i64} {
  func.func @kernel(%arg0: i32, %arg1: memref<2x64x256xf32, #tpu.memory_space<vmem>>, %arg2: memref<64x4xf32, #tpu.memory_space<vmem>>, %arg3: memref<4x64xf32, #tpu.memory_space<vmem>>, %arg4: memref<2x64xf32, #tpu.memory_space<vmem>>) attributes {dimension_semantics = [#tpu.dimension_semantics<parallel>], iteration_bounds = array<i64: 1>, scalar_prefetch = 0 : i64, scratch_operands = 0 : i64, tpu.core_type = #tpu.core_type<tc>, window_params = [{transform_indices = @transform_0, window_bounds = array<i64: 2, 64, 256>}, {pipeline_mode = #tpu.pipeline_mode<synchronous>, transform_indices = @transform_1, window_bounds = array<i64: 64, 4>}, {pipeline_mode = #tpu.pipeline_mode<synchronous>, transform_indices = @transform_2, window_bounds = array<i64: 4, 64>}, {transform_indices = @transform_3, window_bounds = array<i64: 2, 64>}]} {
    %c0 = arith.constant 0 : index
    %c0_0 = arith.constant 0 : index
    %c0_1 = arith.constant 0 : index
    %0 = vector.load %arg1[%c0, %c0_0, %c0_1] : memref<2x64x256xf32, #tpu.memory_space<vmem>>, vector<2x64x256xf32>
    %cst = arith.constant dense<0.000000e+00> : vector<2x64xf32>
    %1 = vector.multi_reduction <add>, %0, %cst [2] : vector<2x64x256xf32> to vector<2x64xf32>
    %cst_2 = arith.constant 3.906250e-03 : f32
    %2 = vector.broadcast %cst_2 : f32 to vector<2x64xf32>
    %3 = arith.mulf %1, %2 : vector<2x64xf32>
    %cst_3 = arith.constant dense<0xFF800000> : vector<2x64xf32>
    %4 = vector.multi_reduction <maximumf>, %0, %cst_3 [2] : vector<2x64x256xf32> to vector<2x64xf32>
    %5 = tpu.concatenate %3, %4 in 0 : vector<2x64xf32>, vector<2x64xf32> -> vector<4x64xf32>
    %c0_4 = arith.constant 0 : index
    %c0_5 = arith.constant 0 : index
    %6 = vector.load %arg2[%c0_4, %c0_5] : memref<64x4xf32, #tpu.memory_space<vmem>>, vector<64x4xf32>
    %c0_6 = arith.constant 0 : index
    %c0_7 = arith.constant 0 : index
    %7 = vector.load %arg3[%c0_6, %c0_7] : memref<4x64xf32, #tpu.memory_space<vmem>>, vector<4x64xf32>
    %cst_8 = arith.constant dense<0.000000e+00> : vector<4x4xf32>
    %8 = tpu.matmul %5, %6, %cst_8 {dimension_numbers = #tpu.dot_dimension_numbers<[1], [0], [0], [1], [0, 0, 1, 1], [], []>} : vector<4x64xf32>, vector<64x4xf32>, vector<4x4xf32> -> vector<4x4xf32>
    %cst_9 = arith.constant 0.000000e+00 : f32
    %9 = vector.broadcast %cst_9 : f32 to vector<4x4xf32>
    %10 = arith.maximumf %8, %9 : vector<4x4xf32>
    %cst_10 = arith.constant dense<0.000000e+00> : vector<4x64xf32>
    %11 = tpu.matmul %10, %7, %cst_10 {dimension_numbers = #tpu.dot_dimension_numbers<[1], [0], [0], [1], [0, 0, 1, 1], [], []>} : vector<4x4xf32>, vector<4x64xf32>, vector<4x64xf32> -> vector<4x64xf32>
    %12 = vector.extract_strided_slice %11 {offsets = [0, 0], sizes = [2, 64], strides = [1, 1]} : vector<4x64xf32> to vector<2x64xf32>
    %13 = vector.extract_strided_slice %11 {offsets = [2, 0], sizes = [2, 64], strides = [1, 1]} : vector<4x64xf32> to vector<2x64xf32>
    %14 = arith.addf %12, %13 : vector<2x64xf32>
    %15 = arith.negf %14 : vector<2x64xf32>
    %16 = math.exp %15 : vector<2x64xf32>
    %cst_11 = arith.constant 1.000000e+00 : f32
    %17 = vector.broadcast %cst_11 : f32 to vector<2x64xf32>
    %18 = arith.addf %17, %16 : vector<2x64xf32>
    %19 = arith.divf %17, %18 : vector<2x64xf32>
    %c0_12 = arith.constant 0 : index
    %c0_13 = arith.constant 0 : index
    %20 = vector.load %arg4[%c0_12, %c0_13] : memref<2x64xf32, #tpu.memory_space<vmem>>, vector<2x64xf32>
    tpu.vector_store %arg4[%c0_12, %c0_13], %19 {strides = array<i32>} : memref<2x64xf32, #tpu.memory_space<vmem>>, vector<2x64xf32>,
    return
  }
  func.func @transform_0(%arg0: i32) -> (i32, i32, i32) {
    %c0_i32 = arith.constant 0 : i32
    %c0_i32_0 = arith.constant 0 : i32
    %c0_i32_1 = arith.constant 0 : i32
    return %arg0, %c0_i32, %c0_i32_0 : i32, i32, i32
  }
  func.func @transform_1(%arg0: i32) -> (i32, i32) {
    %c0_i32 = arith.constant 0 : i32
    %c0_i32_0 = arith.constant 0 : i32
    %c0_i32_1 = arith.constant 0 : i32
    return %c0_i32, %c0_i32_0 : i32, i32
  }
  func.func @transform_2(%arg0: i32) -> (i32, i32) {
    %c0_i32 = arith.constant 0 : i32
    %c0_i32_0 = arith.constant 0 : i32
    %c0_i32_1 = arith.constant 0 : i32
    return %c0_i32, %c0_i32_0 : i32, i32
  }
  func.func @transform_3(%arg0: i32) -> (i32, i32) {
    %c0_i32 = arith.constant 0 : i32
    %c0_i32_0 = arith.constant 0 : i32
    return %arg0, %c0_i32 : i32, i32
  }
}

</mosaic_0001>

<llo_original>
// kernel: tpu_custom_call.1
$region0: #{tpu_custom_call.1}
  #allocation0 [shape = 'u32[]', space=smem, size = 0x4, offset = 0x4, fixed_abs, tag = 'smem constant byte address 0x4 - core index']
  #allocation1 [shape = 'u32[144,128]{1,0:T(1,128)}', space=vmem, size = 0x12000, scoped, tag = 'internal scratch']
  %s0 = inlined_call_operand.hbm [shape: f32[2,64,256], index: 0, kind: input, shape index: {}]
  %s1 = inlined_call_operand.vmem [shape: f32[64,4], index: 1, kind: input, shape index: {}]
  %s2 = inlined_call_operand.vmem [shape: f32[4,64], index: 2, kind: input, shape index: {}]
  %s3 = inlined_call_operand.hbm [shape: f32[2,64], index: 3, kind: output, shape index: {}]
  %s4 = sld [smem:[#allocation0]]
  $region26: #{tpu_custom_call.1} parent=0
    _
  %s6 = ssub.s32 1, %s4
  %s7 = scalar_select 0, %s6, %s4
  $region1: #{tpu_custom_call.1} parent=0
    #allocation2 [shape = 'u8[131072]{0}', space=vmem, size = 0x20000, scoped, tag = 'input window, operand 0, single buffered']
    #allocation3 [shape = 's32[1]{0}', space=sflag, size = 0x4, scoped, tag = 'scoped memory for tpu_custom_call.1']
    #allocation4 [shape = 's32[1]{0}', space=sflag, size = 0x4, scoped, tag = 'scoped memory for tpu_custom_call.1']
    #allocation5 [shape = 'u8[1024]{0}', space=vmem, size = 0x400, scoped, tag = 'output window, operand 0, single buffered']
    %8 = vsyncpa [#allocation3], 0
    %9 = vsyncpa [#allocation4], 0
    // Predicated region
    $region2: #{tpu_custom_call.1} parent=1 // pred_check
      _
    $region3: #{tpu_custom_call.1} parent=1 // pred_check_branch
      %11 = sbr.rel (0) target = $region5
    $region4: #{tpu_custom_call.1} parent=1 // pred_region
      %s13 = ssub.s32 4096, 4096
      %14 = vsyncadd [#allocation3], %s13
      %s15 = sshll.u32 [#allocation2], 4
      %s16 = int_to_ptr.vmem [resolvable:$true] %s15
      %21 = dma.hbm_to_vmem [thread:$0]  %s0, 4096, %s16, [#allocation3], 256, 256, 16
    $region5: #{tpu_custom_call.1} parent=1 // pred_fallthru
      _
    // Predicated region
    $region6: #{tpu_custom_call.1} parent=1 // pred_check
      _
    $region7: #{tpu_custom_call.1} parent=1 // pred_check_branch
      %23 = sbr.rel (0) target = $region9
    $region8: #{tpu_custom_call.1} parent=1 // pred_region
      _
    $region9: #{tpu_custom_call.1} parent=1 // pred_fallthru
      _
    // Predicated region
    $region10: #{tpu_custom_call.1} parent=1 // pred_check
      _
    $region11: #{tpu_custom_call.1} parent=1 // pred_check_branch
      %25 = sbr.rel (0) target = $region13
    $region12: #{tpu_custom_call.1} parent=1 // pred_region
      _
    $region13: #{tpu_custom_call.1} parent=1 // pred_fallthru
      _
    // Predicated region
    $region14: #{tpu_custom_call.1} parent=1 // pred_check
      _
    $region15: #{tpu_custom_call.1} parent=1 // pred_check_branch
      %27 = sbr.rel (0) target = $region17
    $region16: #{tpu_custom_call.1} parent=1 // pred_region
      %28 = dma.done [#allocation3], 4096
    $region17: #{tpu_custom_call.1} parent=1 // pred_fallthru
      _
    %v29 = vld [vmem:[#allocation2] sm:$0xff]
    %v30 = vld [vmem:[#allocation2 + $0x8] sm:$0xff]
    %v31 = vld [vmem:[#allocation2 + $0x10] sm:$0xff]
    %v32 = vld [vmem:[#allocation2 + $0x18] sm:$0xff]
    %v33 = vld [vmem:[#allocation2 + $0x20] sm:$0xff]
    %v34 = vld [vmem:[#allocation2 + $0x28] sm:$0xff]
    %v35 = vld [vmem:[#allocation2 + $0x30] sm:$0xff]
    %v36 = vld [vmem:[#allocation2 + $0x38] sm:$0xff]
    %v37 = vld [vmem:[#allocation2 + $0x40] sm:$0xff]
    %v38 = vld [vmem:[#allocation2 + $0x48] sm:$0xff]
    %v39 = vld [vmem:[#allocation2 + $0x50] sm:$0xff]
    %v40 = vld [vmem:[#allocation2 + $0x58] sm:$0xff]
    %v41 = vld [vmem:[#allocation2 + $0x60] sm:$0xff]
    %v42 = vld [vmem:[#allocation2 + $0x68] sm:$0xff]
    %v43 = vld [vmem:[#allocation2 + $0x70] sm:$0xff]
    %v44 = vld [vmem:[#allocation2 + $0x78] sm:$0xff]
    %v45 = vld [vmem:[#allocation2 + $0x80] sm:$0xff]
    %v46 = vld [vmem:[#allocation2 + $0x88] sm:$0xff]
    %v47 = vld [vmem:[#allocation2 + $0x90] sm:$0xff]
    %v48 = vld [vmem:[#allocation2 + $0x98] sm:$0xff]
    %v49 = vld [vmem:[#allocation2 + $0xa0] sm:$0xff]
    %v50 = vld [vmem:[#allocation2 + $0xa8] sm:$0xff]
    %v51 = vld [vmem:[#allocation2 + $0xb0] sm:$0xff]
    %v52 = vld [vmem:[#allocation2 + $0xb8] sm:$0xff]
    %v53 = vld [vmem:[#allocation2 + $0xc0] sm:$0xff]
    %v54 = vld [vmem:[#allocation2 + $0xc8] sm:$0xff]
    %v55 = vld [vmem:[#allocation2 + $0xd0] sm:$0xff]
    %v56 = vld [vmem:[#allocation2 + $0xd8] sm:$0xff]
    %v57 = vld [vmem:[#allocation2 + $0xe0] sm:$0xff]
    %v58 = vld [vmem:[#allocation2 + $0xe8] sm:$0xff]
    %v59 = vld [vmem:[#allocation2 + $0xf0] sm:$0xff]
    %v60 = vld [vmem:[#allocation2 + $0xf8] sm:$0xff]
    %v61 = vadd.f32 %v29, %v30
    %62 = vadd.xlane.f32.xlu0 %v61
    %v63 = vpop.xlane.xlu0 %62
    %v64 = vadd.f32 %v31, %v32
    %65 = vadd.xlane.f32.xlu0 %v64
    %v66 = vpop.xlane.xlu0 %65
    %v67 = vadd.f32 %v33, %v34
    %68 = vadd.xlane.f32.xlu0 %v67
    %v69 = vpop.xlane.xlu0 %68
    %v70 = vadd.f32 %v35, %v36
    %71 = vadd.xlane.f32.xlu0 %v70
    %v72 = vpop.xlane.xlu0 %71
    %v73 = vadd.f32 %v37, %v38
    %74 = vadd.xlane.f32.xlu0 %v73
    %v75 = vpop.xlane.xlu0 %74
    %v76 = vadd.f32 %v39, %v40
    %77 = vadd.xlane.f32.xlu0 %v76
    %v78 = vpop.xlane.xlu0 %77
    %v79 = vadd.f32 %v41, %v42
    %80 = vadd.xlane.f32.xlu0 %v79
    %v81 = vpop.xlane.xlu0 %80
    %v82 = vadd.f32 %v43, %v44
    %83 = vadd.xlane.f32.xlu0 %v82
    %v84 = vpop.xlane.xlu0 %83
    %v85 = vadd.f32 %v45, %v46
    %86 = vadd.xlane.f32.xlu0 %v85
    %v87 = vpop.xlane.xlu0 %86
    %v88 = vadd.f32 %v47, %v48
    %89 = vadd.xlane.f32.xlu0 %v88
    %v90 = vpop.xlane.xlu0 %89
    %v91 = vadd.f32 %v49, %v50
    %92 = vadd.xlane.f32.xlu0 %v91
    %v93 = vpop.xlane.xlu0 %92
    %v94 = vadd.f32 %v51, %v52
    %95 = vadd.xlane.f32.xlu0 %v94
    %v96 = vpop.xlane.xlu0 %95
    %v97 = vadd.f32 %v53, %v54
    %98 = vadd.xlane.f32.xlu0 %v97
    %v99 = vpop.xlane.xlu0 %98
    %v100 = vadd.f32 %v55, %v56
    %101 = vadd.xlane.f32.xlu0 %v100
    %v102 = vpop.xlane.xlu0 %101
    %v103 = vadd.f32 %v57, %v58
    %104 = vadd.xlane.f32.xlu0 %v103
    %v105 = vpop.xlane.xlu0 %104
    %v106 = vadd.f32 %v59, %v60
    %107 = vadd.xlane.f32.xlu0 %v106
    %v108 = vpop.xlane.xlu0 %107
    %v109 = vmul.f32 %v63, 0.00390625
    %v110 = vmul.f32 %v66, 0.00390625
    %v111 = vmul.f32 %v69, 0.00390625
    %v112 = vmul.f32 %v72, 0.00390625
    %v113 = vmul.f32 %v75, 0.00390625
    %v114 = vmul.f32 %v78, 0.00390625
    %v115 = vmul.f32 %v81, 0.00390625
    %v116 = vmul.f32 %v84, 0.00390625
    %v117 = vmul.f32 %v87, 0.00390625
    %v118 = vmul.f32 %v90, 0.00390625
    %v119 = vmul.f32 %v93, 0.00390625
    %v120 = vmul.f32 %v96, 0.00390625
    %v121 = vmul.f32 %v99, 0.00390625
    %v122 = vmul.f32 %v102, 0.00390625
    %v123 = vmul.f32 %v105, 0.00390625
    %v124 = vmul.f32 %v108, 0.00390625
    %v125 = vmax.f32 %v29, %v30
    %126 = vmax.xlane.f32.xlu0 %v125
    %v127 = vpop.xlane.xlu0 %126
    %v128 = vmax.f32 %v31, %v32
    %129 = vmax.xlane.f32.xlu0 %v128
    %v130 = vpop.xlane.xlu0 %129
    %v131 = vmax.f32 %v33, %v34
    %132 = vmax.xlane.f32.xlu0 %v131
    %v133 = vpop.xlane.xlu0 %132
    %v134 = vmax.f32 %v35, %v36
    %135 = vmax.xlane.f32.xlu0 %v134
    %v136 = vpop.xlane.xlu0 %135
    %v137 = vmax.f32 %v37, %v38
    %138 = vmax.xlane.f32.xlu0 %v137
    %v139 = vpop.xlane.xlu0 %138
    %v140 = vmax.f32 %v39, %v40
    %141 = vmax.xlane.f32.xlu0 %v140
    %v142 = vpop.xlane.xlu0 %141
    %v143 = vmax.f32 %v41, %v42
    %144 = vmax.xlane.f32.xlu0 %v143
    %v145 = vpop.xlane.xlu0 %144
    %v146 = vmax.f32 %v43, %v44
    %147 = vmax.xlane.f32.xlu0 %v146
    %v148 = vpop.xlane.xlu0 %147
    %v149 = vmax.f32 %v45, %v46
    %150 = vmax.xlane.f32.xlu0 %v149
    %v151 = vpop.xlane.xlu0 %150
    %v152 = vmax.f32 %v47, %v48
    %153 = vmax.xlane.f32.xlu0 %v152
    %v154 = vpop.xlane.xlu0 %153
    %v155 = vmax.f32 %v49, %v50
    %156 = vmax.xlane.f32.xlu0 %v155
    %v157 = vpop.xlane.xlu0 %156
    %v158 = vmax.f32 %v51, %v52
    %159 = vmax.xlane.f32.xlu0 %v158
    %v160 = vpop.xlane.xlu0 %159
    %v161 = vmax.f32 %v53, %v54
    %162 = vmax.xlane.f32.xlu0 %v161
    %v163 = vpop.xlane.xlu0 %162
    %v164 = vmax.f32 %v55, %v56
    %165 = vmax.xlane.f32.xlu0 %v164
    %v166 = vpop.xlane.xlu0 %165
    %v167 = vmax.f32 %v57, %v58
    %168 = vmax.xlane.f32.xlu0 %v167
    %v169 = vpop.xlane.xlu0 %168
    %v170 = vmax.f32 %v59, %v60
    %171 = vmax.xlane.f32.xlu0 %v170
    %v172 = vpop.xlane.xlu0 %171
    %v189 = vlaneseq
    %v190 = vand.u32 %v189, 127
    %v191 = vlaneseq
    %v192 = vshrl.u32 %v191, 7
    %v193 = vsub.s32 %v190, %v192
    %v194 = vrot.slane %v109, %v193
    %v195 = vadd.s32 %v190, 4294967288
    %v196 = vlaneseq
    %v197 = vshrl.u32 %v196, 7
    %v198 = vsub.s32 %v195, %v197
    %v199 = vrot.slane %v110, %v198
    %vm200 = vcmask 130112
    %v201 = vsel %vm200, %v199, %v194
    %v202 = vadd.s32 %v190, 4294967280
    %v203 = vlaneseq
    %v204 = vshrl.u32 %v203, 7
    %v205 = vsub.s32 %v202, %v204
    %v206 = vrot.slane %v111, %v205
    %vm207 = vcmask 195712
    %v208 = vsel %vm207, %v206, %v201
    %v209 = vadd.s32 %v190, 4294967272
    %v210 = vlaneseq
    %v211 = vshrl.u32 %v210, 7
    %v212 = vsub.s32 %v209, %v211
    %v213 = vrot.slane %v112, %v212
    %vm214 = vcmask 261312
    %v215 = vsel %vm214, %v213, %v208
    %v216 = vadd.s32 %v190, 4294967264
    %v217 = vlaneseq
    %v218 = vshrl.u32 %v217, 7
    %v219 = vsub.s32 %v216, %v218
    %v220 = vrot.slane %v113, %v219
    %vm221 = vcmask 326912
    %v222 = vsel %vm221, %v220, %v215
    %v223 = vadd.s32 %v190, 4294967256
    %v224 = vlaneseq
    %v225 = vshrl.u32 %v224, 7
    %v226 = vsub.s32 %v223, %v225
    %v227 = vrot.slane %v114, %v226
    %vm228 = vcmask 392512
    %v229 = vsel %vm228, %v227, %v222
    %v230 = vadd.s32 %v190, 4294967248
    %v231 = vlaneseq
    %v232 = vshrl.u32 %v231, 7
    %v233 = vsub.s32 %v230, %v232
    %v234 = vrot.slane %v115, %v233
    %vm235 = vcmask 458112
    %v236 = vsel %vm235, %v234, %v229
    %v237 = vadd.s32 %v190, 4294967240
    %v238 = vlaneseq
    %v239 = vshrl.u32 %v238, 7
    %v240 = vsub.s32 %v237, %v239
    %v241 = vrot.slane %v116, %v240
    %vm242 = vcmask 523712
    %v243 = vsel %vm242, %v241, %v236
    %v244 = vlaneseq
    %v245 = vshrl.u32 %v244, 7
    %v246 = vsub.s32 %v190, %v245
    %v247 = vrot.slane %v117, %v246
    %v248 = vlaneseq
    %v249 = vshrl.u32 %v248, 7
    %v250 = vsub.s32 %v195, %v249
    %v251 = vrot.slane %v118, %v250
    %v252 = vsel %vm200, %v251, %v247
    %v253 = vlaneseq
    %v254 = vshrl.u32 %v253, 7
    %v255 = vsub.s32 %v202, %v254
    %v256 = vrot.slane %v119, %v255
    %v257 = vsel %vm207, %v256, %v252
    %v258 = vlaneseq
    %v259 = vshrl.u32 %v258, 7
    %v260 = vsub.s32 %v209, %v259
    %v261 = vrot.slane %v120, %v260
    %v262 = vsel %vm214, %v261, %v257
    %v263 = vlaneseq
    %v264 = vshrl.u32 %v263, 7
    %v265 = vsub.s32 %v216, %v264
    %v266 = vrot.slane %v121, %v265
    %v267 = vsel %vm221, %v266, %v262
    %v268 = vlaneseq
    %v269 = vshrl.u32 %v268, 7
    %v270 = vsub.s32 %v223, %v269
    %v271 = vrot.slane %v122, %v270
    %v272 = vsel %vm228, %v271, %v267
    %v273 = vlaneseq
    %v274 = vshrl.u32 %v273, 7
    %v275 = vsub.s32 %v230, %v274
    %v276 = vrot.slane %v123, %v275
    %v277 = vsel %vm235, %v276, %v272
    %v278 = vlaneseq
    %v279 = vshrl.u32 %v278, 7
    %v280 = vsub.s32 %v237, %v279
    %v281 = vrot.slane %v124, %v280
    %v282 = vsel %vm242, %v281, %v277
    %vm283 = vcmask 1041409
    %v284 = vsel %vm283, %v282, %v243
    %v302 = vlaneseq
    %v303 = vshrl.u32 %v302, 7
    %v304 = vsub.s32 %v190, %v303
    %v305 = vrot.slane %v127, %v304
    %v306 = vlaneseq
    %v307 = vshrl.u32 %v306, 7
    %v308 = vsub.s32 %v195, %v307
    %v309 = vrot.slane %v130, %v308
    %v310 = vsel %vm200, %v309, %v305
    %v311 = vlaneseq
    %v312 = vshrl.u32 %v311, 7
    %v313 = vsub.s32 %v202, %v312
    %v314 = vrot.slane %v133, %v313
    %v315 = vsel %vm207, %v314, %v310
    %v316 = vlaneseq
    %v317 = vshrl.u32 %v316, 7
    %v318 = vsub.s32 %v209, %v317
    %v319 = vrot.slane %v136, %v318
    %v320 = vsel %vm214, %v319, %v315
    %v321 = vlaneseq
    %v322 = vshrl.u32 %v321, 7
    %v323 = vsub.s32 %v216, %v322
    %v324 = vrot.slane %v139, %v323
    %v325 = vsel %vm221, %v324, %v320
    %v326 = vlaneseq
    %v327 = vshrl.u32 %v326, 7
    %v328 = vsub.s32 %v223, %v327
    %v329 = vrot.slane %v142, %v328
    %v330 = vsel %vm228, %v329, %v325
    %v331 = vlaneseq
    %v332 = vshrl.u32 %v331, 7
    %v333 = vsub.s32 %v230, %v332
    %v334 = vrot.slane %v145, %v333
    %v335 = vsel %vm235, %v334, %v330
    %v336 = vlaneseq
    %v337 = vshrl.u32 %v336, 7
    %v338 = vsub.s32 %v237, %v337
    %v339 = vrot.slane %v148, %v338
    %v340 = vsel %vm242, %v339, %v335
    %v341 = vlaneseq
    %v342 = vshrl.u32 %v341, 7
    %v343 = vsub.s32 %v190, %v342
    %v344 = vrot.slane %v151, %v343
    %v345 = vlaneseq
    %v346 = vshrl.u32 %v345, 7
    %v347 = vsub.s32 %v195, %v346
    %v348 = vrot.slane %v154, %v347
    %v349 = vsel %vm200, %v348, %v344
    %v350 = vlaneseq
    %v351 = vshrl.u32 %v350, 7
    %v352 = vsub.s32 %v202, %v351
    %v353 = vrot.slane %v157, %v352
    %v354 = vsel %vm207, %v353, %v349
    %v355 = vlaneseq
    %v356 = vshrl.u32 %v355, 7
    %v357 = vsub.s32 %v209, %v356
    %v358 = vrot.slane %v160, %v357
    %v359 = vsel %vm214, %v358, %v354
    %v360 = vlaneseq
    %v361 = vshrl.u32 %v360, 7
    %v362 = vsub.s32 %v216, %v361
    %v363 = vrot.slane %v163, %v362
    %v364 = vsel %vm221, %v363, %v359
    %v365 = vlaneseq
    %v366 = vshrl.u32 %v365, 7
    %v367 = vsub.s32 %v223, %v366
    %v368 = vrot.slane %v166, %v367
    %v369 = vsel %vm228, %v368, %v364
    %v370 = vlaneseq
    %v371 = vshrl.u32 %v370, 7
    %v372 = vsub.s32 %v230, %v371
    %v373 = vrot.slane %v169, %v372
    %v374 = vsel %vm235, %v373, %v369
    %v375 = vlaneseq
    %v376 = vshrl.u32 %v375, 7
    %v377 = vsub.s32 %v237, %v376
    %v378 = vrot.slane %v172, %v377
    %v379 = vsel %vm242, %v378, %v374
    %vm380 = vcmask 1043459
    %v381 = vsel %vm380, %v379, %v340
    %vm383 = vcmask 1041408
    %v384 = vsel %vm383, %v284, %v381
    %v385 = vld [vmem:[%s1] sm:$0xff]
    %v386 = vld [vmem:[%s1 + $0x8] sm:$0xff]
    %v387 = vld [vmem:[%s1 + $0x10] sm:$0xff]
    %v388 = vld [vmem:[%s1 + $0x18] sm:$0xff]
    %v389 = vld [vmem:[%s1 + $0x20] sm:$0xff]
    %v390 = vld [vmem:[%s1 + $0x28] sm:$0xff]
    %v391 = vld [vmem:[%s1 + $0x30] sm:$0xff]
    %v392 = vld [vmem:[%s1 + $0x38] sm:$0xff]
    %v393 = vld [vmem:[%s2] sm:$0xf]
    %vm394 = vcmask 523264
    %v396 = vsel %vm394, %v384, 0
    %398 = vmatprep.subr.mxu0 0.0
    %399 = vmatpush1.msra.mxu0 %v385
    %400 = vmatprep.subr.mxu0 0.0
    %401 = vmatpush1.msra.mxu0 %v386
    %402 = vmatprep.subr.mxu0 0.0
    %403 = vmatpush1.msra.mxu0 %v387
    %404 = vmatprep.subr.mxu0 0.0
    %405 = vmatpush1.msra.mxu0 %v388
    %406 = vmatprep.subr.mxu0 0.0
    %407 = vmatpush1.msra.mxu0 %v389
    %408 = vmatprep.subr.mxu0 0.0
    %409 = vmatpush1.msra.mxu0 %v390
    %410 = vmatprep.subr.mxu0 0.0
    %411 = vmatpush1.msra.mxu0 %v391
    %412 = vmatprep.subr.mxu0 0.0
    %413 = vmatpush1.msra.mxu0 %v392
    %414 = vmatprep.subr.mxu0 0.0
    %415 = vmatpush1.msra.mxu0 0.0
    %416 = vmatprep.subr.mxu0 0.0
    %417 = vmatpush1.msra.mxu0 0.0
    %418 = vmatprep.subr.mxu0 0.0
    %419 = vmatpush1.msra.mxu0 0.0
    %420 = vmatprep.subr.mxu0 0.0
    %421 = vmatpush1.msra.mxu0 0.0
    %422 = vmatprep.subr.mxu0 0.0
    %423 = vmatpush1.msra.mxu0 0.0
    %424 = vmatprep.subr.mxu0 0.0
    %425 = vmatpush1.msra.mxu0 0.0
    %426 = vmatprep.subr.mxu0 0.0
    %427 = vmatpush1.msra.mxu0 0.0
    %428 = vmatprep.subr.mxu0 0.0
    %429 = vmatpush1.msra.mxu0 0.0
    %430 = vmatprep.subr.mxu0 0.0
    %431 = vmatpush1.msra.mxu0 0.0
    %432 = vmatprep.subr.mxu0 0.0
    %433 = vmatpush1.msra.mxu0 0.0
    %434 = vmatprep.subr.mxu0 0.0
    %435 = vmatpush1.msra.mxu0 0.0
    %436 = vmatprep.subr.mxu0 0.0
    %437 = vmatpush1.msra.mxu0 0.0
    %438 = vmatprep.subr.mxu0 0.0
    %439 = vmatpush1.msra.mxu0 0.0
    %440 = vmatprep.subr.mxu0 0.0
    %441 = vmatpush1.msra.mxu0 0.0
    %442 = vmatprep.subr.mxu0 0.0
    %443 = vmatpush1.msra.mxu0 0.0
    %444 = vmatprep.subr.mxu0 0.0
    %445 = vmatpush1.msra.mxu0 0.0
    %446 = vmatprep.subr.mxu0 0.0
    %447 = vmatpush1.msra.mxu0 0.0
    %448 = vmatprep.subr.mxu0 0.0
    %449 = vmatpush1.msra.mxu0 0.0
    %450 = vmatprep.subr.mxu0 0.0
    %451 = vmatpush1.msra.mxu0 0.0
    %452 = vmatprep.subr.mxu0 0.0
    %453 = vmatpush1.msra.mxu0 0.0
    %454 = vmatprep.subr.mxu0 0.0
    %455 = vmatpush1.msra.mxu0 0.0
    %456 = vmatprep.subr.mxu0 0.0
    %457 = vmatpush1.msra.mxu0 0.0
    %458 = vmatprep.subr.mxu0 0.0
    %459 = vmatpush1.msra.mxu0 0.0
    %460 = vmatprep.subr.mxu0 0.0
    %461 = vmatpush1.msra.mxu0 0.0
    %462 = vmatprep.mubr.f32.mxu0 0.0
    %463 = vmatmul.mubr.f32.gmra.mrb[0].mxu0 %v396
    %v464 = vpop.f32.mrb[0].mxu0
    %v465 = vadd.f32 0.0, %v464
    %v466 = vpop.f32.mrb[0].mxu0
    %467 = vdwg.mxu0
    %v468 = vmax.f32 %v465, 0.0
    %vm469 = vcmask 31744
    %v471 = vsel %vm469, %v468, 0
    %vm473 = vcmask 1043456
    %v475 = vsel %vm473, %v393, 0
    %477 = vmatprep.subr.mxu0 0.0
    %478 = vmatpush1.msra.mxu0 %v475
    %479 = vmatprep.subr.mxu0 0.0
    %480 = vmatpush1.msra.mxu0 0.0
    %481 = vmatprep.subr.mxu0 0.0
    %482 = vmatpush1.msra.mxu0 0.0
    %483 = vmatprep.subr.mxu0 0.0
    %484 = vmatpush1.msra.mxu0 0.0
    %485 = vmatprep.subr.mxu0 0.0
    %486 = vmatpush1.msra.mxu0 0.0
    %487 = vmatprep.subr.mxu0 0.0
    %488 = vmatpush1.msra.mxu0 0.0
    %489 = vmatprep.subr.mxu0 0.0
    %490 = vmatpush1.msra.mxu0 0.0
    %491 = vmatprep.subr.mxu0 0.0
    %492 = vmatpush1.msra.mxu0 0.0
    %493 = vmatprep.subr.mxu0 0.0
    %494 = vmatpush1.msra.mxu0 0.0
    %495 = vmatprep.subr.mxu0 0.0
    %496 = vmatpush1.msra.mxu0 0.0
    %497 = vmatprep.subr.mxu0 0.0
    %498 = vmatpush1.msra.mxu0 0.0
    %499 = vmatprep.subr.mxu0 0.0
    %500 = vmatpush1.msra.mxu0 0.0
    %501 = vmatprep.subr.mxu0 0.0
    %502 = vmatpush1.msra.mxu0 0.0
    %503 = vmatprep.subr.mxu0 0.0
    %504 = vmatpush1.msra.mxu0 0.0
    %505 = vmatprep.subr.mxu0 0.0
    %506 = vmatpush1.msra.mxu0 0.0
    %507 = vmatprep.subr.mxu0 0.0
    %508 = vmatpush1.msra.mxu0 0.0
    %509 = vmatprep.subr.mxu0 0.0
    %510 = vmatpush1.msra.mxu0 0.0
    %511 = vmatprep.subr.mxu0 0.0
    %512 = vmatpush1.msra.mxu0 0.0
    %513 = vmatprep.subr.mxu0 0.0
    %514 = vmatpush1.msra.mxu0 0.0
    %515 = vmatprep.subr.mxu0 0.0
    %516 = vmatpush1.msra.mxu0 0.0
    %517 = vmatprep.subr.mxu0 0.0
    %518 = vmatpush1.msra.mxu0 0.0
    %519 = vmatprep.subr.mxu0 0.0
    %520 = vmatpush1.msra.mxu0 0.0
    %521 = vmatprep.subr.mxu0 0.0
    %522 = vmatpush1.msra.mxu0 0.0
    %523 = vmatprep.subr.mxu0 0.0
    %524 = vmatpush1.msra.mxu0 0.0
    %525 = vmatprep.subr.mxu0 0.0
    %526 = vmatpush1.msra.mxu0 0.0
    %527 = vmatprep.subr.mxu0 0.0
    %528 = vmatpush1.msra.mxu0 0.0
    %529 = vmatprep.subr.mxu0 0.0
    %530 = vmatpush1.msra.mxu0 0.0
    %531 = vmatprep.subr.mxu0 0.0
    %532 = vmatpush1.msra.mxu0 0.0
    %533 = vmatprep.subr.mxu0 0.0
    %534 = vmatpush1.msra.mxu0 0.0
    %535 = vmatprep.subr.mxu0 0.0
    %536 = vmatpush1.msra.mxu0 0.0
    %537 = vmatprep.subr.mxu0 0.0
    %538 = vmatpush1.msra.mxu0 0.0
    %539 = vmatprep.subr.mxu0 0.0
    %540 = vmatpush1.msra.mxu0 0.0
    %541 = vmatprep.mubr.f32.mxu0 0.0
    %542 = vmatmul.mubr.f32.gmra.mrb[0].mxu0 %v471
    %v543 = vpop.f32.mrb[0].mxu0
    %v544 = vadd.f32 0.0, %v543
    %v545 = vpop.f32.mrb[0].mxu0
    %546 = vdwg.mxu0
    %v548 = vrot.slane %v544, 2
    %v550 = vadd.f32 %v544, %v548
    %v551 = vxor.u32 %v550, 2147483648
    %v552 = vmul.f32 %v551, 1.442695
    %v553 = vpow.pop %v552
    %v554 = vadd.f32 %v553, 1.0
    %v555 = vrcp.pop %v554
    %v556 = vmul.f32 1.0, %v555
    %vm557 = vcmask 517120
    %558 = vst.msk [vmem:[#allocation5] sm:$0x3] %vm557, %v556
    // Predicated region
    $region18: #{tpu_custom_call.1} parent=1 // pred_check
      _
    $region19: #{tpu_custom_call.1} parent=1 // pred_check_branch
      %560 = sbr.rel (0) target = $region21
    $region20: #{tpu_custom_call.1} parent=1 // pred_region
      %s562 = ssub.s32 32, 32
      %563 = vsyncadd [#allocation4], %s562
      %s565 = sshll.u32 [#allocation5], 4
      %s566 = int_to_ptr.vmem [resolvable:$true] %s565
      %568 = dma.vmem_to_hbm [thread:$0]  %s566, 32, %s3, [#allocation4]
    $region21: #{tpu_custom_call.1} parent=1 // pred_fallthru
      _
    // Predicated region
    $region22: #{tpu_custom_call.1} parent=1 // pred_check
      _
    $region23: #{tpu_custom_call.1} parent=1 // pred_check_branch
      %570 = sbr.rel (0) target = $region25
    $region24: #{tpu_custom_call.1} parent=1 // pred_region
      %571 = dma.done [#allocation4], 32
    $region25: #{tpu_custom_call.1} parent=1 // pred_fallthru
      _
    %572 = vsyncpa [#allocation3], 1
    %573 = vsyncpa [#allocation4], 1

</llo_original>
